<compile_context>
chip_gen: v5e
topology: v5e:2x2
jax: 0.10.0
libtpu: 0.0.40
codegen_flags: <defaults>
</compile_context>

<pallas_src>
import math

import numpy as np

import jax
import jax.numpy as jnp
from jax.experimental import pallas as pl
from jax.experimental.pallas import tpu as pltpu


# ----------------------------------------------------------------------------
# Tile planning
# ----------------------------------------------------------------------------
def _round_up(n, m):
    return ((n + m - 1) // m) * m


def _plan_tile(n, align, cap):
    """Return (tile, padded_n) with tile | padded_n and tile <= max(cap, n<=cap)."""
    if n <= cap:
        # Full extent: always legal (block dim == array dim), no padding pass.
        return n, n
    # Largest aligned divisor of n that fits the cap.
    for t in range(cap - (cap % align), align - 1, -align):
        if n % t == 0:
            return t, n
    # No aligned divisor: pad up to a multiple of `align`, tile that.
    n_pad = _round_up(n, align)
    for t in range(cap - (cap % align), align - 1, -align):
        if n_pad % t == 0:
            return t, n_pad
    return align, n_pad


# ----------------------------------------------------------------------------
# Kernel
# ----------------------------------------------------------------------------
def _make_idwt_kernel(G, TH, TW, KW, KH, scale):
    """Build the per-tile kernel.

    p_ref: (2, KW, 2*KW)   lane  (horizontal) synthesis blocks [lo, hi], entries +-1/0
    m_ref: (2, 2*KH, KH)   sublane (vertical) synthesis blocks [lo, hi], entries +-1/0
    x_ref: (4, G, TH, TW)  [LL, LH, HL, HH] planes of G channel tiles
    o_ref: (G, 2*TH, 2*TW) reconstructed output tiles
    rlo_ref, rhi_ref: (TH, 2*TW) f32 VMEM scratch (row-synthesis intermediates)
    """
    n_w = TW // KW
    n_h = TH // KH

    def kernel(p_ref, m_ref, x_ref, o_ref, rlo_ref, rhi_ref):
        p_lo = p_ref[0]
        p_hi = p_ref[1]
        m_lo = m_ref[0]
        m_hi = m_ref[1]
        for g in range(G):
            # Horizontal (lane) synthesis, one KW-wide chunk at a time so the
            # MXU contraction stays at KW (block-diagonal kron structure).
            for c in range(n_w):
                ci = slice(c * KW, (c + 1) * KW)
                co = slice(2 * c * KW, 2 * (c + 1) * KW)
                ll = x_ref[0, g, :, ci]
                lh = x_ref[1, g, :, ci]
                hl = x_ref[2, g, :, ci]
                hh = x_ref[3, g, :, ci]
                rlo_ref[:, co] = (
                    jnp.dot(ll, p_lo, preferred_element_type=jnp.float32)
                    + jnp.dot(hl, p_hi, preferred_element_type=jnp.float32))
                rhi_ref[:, co] = (
                    jnp.dot(lh, p_lo, preferred_element_type=jnp.float32)
                    + jnp.dot(hh, p_hi, preferred_element_type=jnp.float32))
            # Vertical (sublane) synthesis, KH rows at a time; single VPU scale
            # (s^2) applied at the store.
            for r in range(n_h):
                ri = slice(r * KH, (r + 1) * KH)
                ro = slice(2 * r * KH, 2 * (r + 1) * KH)
                row_lo = rlo_ref[ri, :]
                row_hi = rhi_ref[ri, :]
                out = (jnp.dot(m_lo, row_lo, preferred_element_type=jnp.float32)
                       + jnp.dot(m_hi, row_hi, preferred_element_type=jnp.float32))
                o_ref[g, ro, :] = (scale * out).astype(o_ref.dtype)

    return kernel


# ----------------------------------------------------------------------------
# Wrapper
# ----------------------------------------------------------------------------
def _idwt_2d_impl(x, sign_lo, sign_hi, scale):
    """Inverse 2-D Haar DWT.  x: (B, 4*C, H, W) f32 -> (B, C, 2*H, 2*W) f32."""
    B, C4, H, W = x.shape
    assert C4 % 4 == 0, "channel dim must be 4*C"
    C = C4 // 4

    # (B, 4*C, H, W) -> (B, 4, C, H, W): band k of channel c at [b, k, c]
    # (matches x.view(B, 4, -1, H, W) in the torch forward; free view).
    x5 = x.reshape(B, 4, C, H, W)

    TH, Hp = _plan_tile(H, 8, 256)
    TW, Wp = _plan_tile(W, 128, 512)
    if (Hp, Wp) != (H, W):
        x5 = jnp.pad(x5, ((0, 0), (0, 0), (0, 0), (0, Hp - H), (0, Wp - W)))

    # Contraction block sizes (MXU-native 128 whenever the tile allows it).
    KW = 128 if TW % 128 == 0 else TW
    KH = 128 if TH % 128 == 0 else TH

    # Group several channel planes per grid step when one tile covers a whole
    # plane (amortizes per-step pipeline overhead for small H, W).
    G = 1
    if TH == Hp and TW == Wp:
        per_plane_bytes = (4 * TH * TW + (2 * TH) * (2 * TW)) * 4
        for g in range(min(C, 8), 0, -1):
            if C % g == 0 and g * per_plane_bytes <= (4 << 20):
                G = g
                break

    f32 = jnp.float32
    sl = jnp.asarray(sign_lo, f32)      # (2,)  e.g. [+1, +1]
    sh = jnp.asarray(sign_hi, f32)      # (2,)  e.g. [+1, -1]
    # Lane synthesis blocks: P[k, 2k+q] = sign[q].
    p = jnp.stack([jnp.kron(jnp.eye(KW, dtype=f32), sl[None, :]),
                   jnp.kron(jnp.eye(KW, dtype=f32), sh[None, :])])        # (2, KW, 2KW)
    # Sublane synthesis blocks: M[2k+p, k] = sign[p].
    m = jnp.stack([jnp.kron(jnp.eye(KH, dtype=f32), sl[:, None]),
                   jnp.kron(jnp.eye(KH, dtype=f32), sh[:, None])])        # (2, 2KH, KH)

    TH2, TW2 = 2 * TH, 2 * TW
    grid = (B, C // G, Hp // TH, Wp // TW)

    kernel = _make_idwt_kernel(G, TH, TW, KW, KH, scale)

    # VMEM accounting: double buffers for every input/output stream (constant
    # index maps still allocate them) + the row-synthesis scratch + headroom.
    vmem_est = 4 * (2 * (4 * G * TH * TW)        # x tile, double-buffered
                    + 2 * (G * TH2 * TW2)        # out tile, double-buffered
                    + 2 * (2 * KW * 2 * KW)      # P, double-buffered
                    + 2 * (2 * 2 * KH * KH)      # M, double-buffered
                    + 2 * (TH * TW2))            # row_lo / row_hi scratch
    # v7x has only 64 MiB physical VMEM per TensorCore: never request more than
    # 48 MiB so Mosaic keeps room for internal scratch.
    vmem_limit = int(min(max(int(vmem_est * 1.5), 16 << 20), 48 << 20))

    planes = B * C * Hp * Wp
    cost = pl.CostEstimate(
        flops=int(16 * (KW + KH) * planes),
        transcendentals=0,
        bytes_accessed=int(32 * planes))         # 4*planes f32 in + 4*planes f32 out

    out = pl.pallas_call(
        kernel,
        out_shape=jax.ShapeDtypeStruct((B, C, 2 * Hp, 2 * Wp), x.dtype),
        grid=grid,
        in_specs=[
            pl.BlockSpec((2, KW, 2 * KW), lambda b, c, h, w: (0, 0, 0)),
            pl.BlockSpec((2, 2 * KH, KH), lambda b, c, h, w: (0, 0, 0)),
            pl.BlockSpec((None, 4, G, TH, TW),
                         lambda b, c, h, w: (b, 0, c, h, w)),
        ],
        out_specs=pl.BlockSpec((None, G, TH2, TW2),
                               lambda b, c, h, w: (b, c, h, w)),
        scratch_shapes=[pltpu.VMEM((TH, TW2), jnp.float32),
                        pltpu.VMEM((TH, TW2), jnp.float32)],
        compiler_params=pltpu.CompilerParams(
            dimension_semantics=("parallel", "parallel", "parallel", "parallel"),
            vmem_limit_bytes=vmem_limit),
        cost_estimate=cost,
    )(p, m, x5)

    if (Hp, Wp) != (H, W):
        out = out[:, :, :2 * H, :2 * W]
    return out


def _build_idwt_2d(wave="haar"):
    """Returns (jitted idwt(x), rec_lo, rec_hi) for the given wavelet."""
    if wave != "haar":
        # TODO(synk): longer wavelets (pywt) need an overlapping synthesis path.
        raise NotImplementedError("only 'haar' is built in-script")
    s = np.float32(1.0 / math.sqrt(2.0))
    rec_lo = np.array([s, s], dtype=np.float32)
    rec_hi = np.array([s, -s], dtype=np.float32)
    sign_lo = (1.0, 1.0)
    sign_hi = (1.0, -1.0)
    # Same f32 product the torch module bakes into its filters (s*s in f32).
    scale = np.float32(rec_lo[0]) * np.float32(rec_lo[0])
    fn = jax.jit(lambda x: _idwt_2d_impl(x, sign_lo, sign_hi, scale))
    return fn, rec_lo, rec_hi


idwt_2d, _REC_LO, _REC_HI = _build_idwt_2d("haar")


# ----------------------------------------------------------------------------
# Plain-JAX reference (mirrors the torch grouped conv_transpose2d, stride 2)
# ----------------------------------------------------------------------------
def _reference_idwt(x, rec_lo, rec_hi):
    B, C4, H, W = x.shape
    C = C4 // 4
    rec_lo = jnp.asarray(rec_lo, jnp.float32)
    rec_hi = jnp.asarray(rec_hi, jnp.float32)
    # torch: w_xy[p, q] = rec_x[q] * rec_y[p]
    w_ll = rec_lo[None, :] * rec_lo[:, None]
    w_lh = rec_lo[None, :] * rec_hi[:, None]
    w_hl = rec_hi[None, :] * rec_lo[:, None]
    w_hh = rec_hi[None, :] * rec_hi[:, None]
    filt = jnp.stack([w_ll, w_lh, w_hl, w_hh], axis=0)        # (4, 2, 2)
    xr = x.reshape(B, 4, C, H, W)
    y = jnp.einsum('bkchw,kpq->bchpwq', xr, filt)             # (B, C, H, 2, W, 2)
    return y.reshape(B, C, 2 * H, 2 * W)


if __name__ == "__main__":
    key = jax.random.PRNGKey(0)

    # Case 1: small planes (exercises channel grouping G>1, masked small tiles).
    B, C4, H, W = 2, 8, 16, 16            # 4*C = 8 -> C = 2 output channels
    x_small = jax.random.normal(key, (B, C4, H, W), dtype=jnp.float32)
    y_small = jax.block_until_ready(idwt_2d(x_small))
    y_small_ref = _reference_idwt(x_small, _REC_LO, _REC_HI)
    assert y_small.shape == (B, C4 // 4, 2 * H, 2 * W)
    assert jnp.allclose(y_small, y_small_ref, atol=1e-5, rtol=1e-5)

    # Case 2: larger plane (exercises the blocked 128-wide contraction chunks).
    B2, C42, H2, W2 = 1, 4, 256, 256
    x_big = jax.random.normal(jax.random.PRNGKey(1), (B2, C42, H2, W2),
                              dtype=jnp.float32)
    y_big = jax.block_until_ready(idwt_2d(x_big))
    y_big_ref = _reference_idwt(x_big, _REC_LO, _REC_HI)
    assert y_big.shape == (B2, C42 // 4, 2 * H2, 2 * W2)
    assert jnp.allclose(y_big, y_big_ref, atol=1e-5, rtol=1e-5)

    print("KERNEL_OK")
</pallas_src>

<mosaic_0001>
module attributes {stable_mosaic.version = 11 : i64} {
  func.func @kernel(%arg0: i32, %arg1: i32, %arg2: i32, %arg3: i32, %arg4: memref<2x16x32xf32, #tpu.memory_space<vmem>>, %arg5: memref<2x32x16xf32, #tpu.memory_space<vmem>>, %arg6: memref<1x4x2x16x16xf32, #tpu.memory_space<vmem>>, %arg7: memref<1x2x32x32xf32, #tpu.memory_space<vmem>>, %arg8: memref<16x32xf32, #tpu.memory_space<vmem>>, %arg9: memref<16x32xf32, #tpu.memory_space<vmem>>) attributes {dimension_semantics = [#tpu.dimension_semantics<parallel>, #tpu.dimension_semantics<parallel>, #tpu.dimension_semantics<parallel>, #tpu.dimension_semantics<parallel>], iteration_bounds = array<i64: 2, 1, 1, 1>, scalar_prefetch = 0 : i64, scratch_operands = 2 : i64, tpu.core_type = #tpu.core_type<tc>, window_params = [{pipeline_mode = #tpu.pipeline_mode<synchronous>, transform_indices = @transform_0, window_bounds = array<i64: 2, 16, 32>}, {pipeline_mode = #tpu.pipeline_mode<synchronous>, transform_indices = @transform_1, window_bounds = array<i64: 2, 32, 16>}, {transform_indices = @transform_2, window_bounds = array<i64: 1, 4, 2, 16, 16>}, {transform_indices = @transform_3, window_bounds = array<i64: 1, 2, 32, 32>}]} {
    %c0 = arith.constant 0 : index
    %c0_0 = arith.constant 0 : index
    %c0_1 = arith.constant 0 : index
    %0 = vector.load %arg4[%c0, %c0_0, %c0_1] : memref<2x16x32xf32, #tpu.memory_space<vmem>>, vector<1x16x32xf32>
    %1 = vector.shape_cast %0 : vector<1x16x32xf32> to vector<16x32xf32>
    %c1 = arith.constant 1 : index
    %c0_2 = arith.constant 0 : index
    %c0_3 = arith.constant 0 : index
    %2 = vector.load %arg4[%c1, %c0_2, %c0_3] : memref<2x16x32xf32, #tpu.memory_space<vmem>>, vector<1x16x32xf32>
    %3 = vector.shape_cast %2 : vector<1x16x32xf32> to vector<16x32xf32>
    %c0_4 = arith.constant 0 : index
    %c0_5 = arith.constant 0 : index
    %c0_6 = arith.constant 0 : index
    %4 = vector.load %arg5[%c0_4, %c0_5, %c0_6] : memref<2x32x16xf32, #tpu.memory_space<vmem>>, vector<1x32x16xf32>
    %5 = vector.shape_cast %4 : vector<1x32x16xf32> to vector<32x16xf32>
    %c1_7 = arith.constant 1 : index
    %c0_8 = arith.constant 0 : index
    %c0_9 = arith.constant 0 : index
    %6 = vector.load %arg5[%c1_7, %c0_8, %c0_9] : memref<2x32x16xf32, #tpu.memory_space<vmem>>, vector<1x32x16xf32>
    %7 = vector.shape_cast %6 : vector<1x32x16xf32> to vector<32x16xf32>
    %c0_10 = arith.constant 0 : index
    %c0_11 = arith.constant 0 : index
    %c0_12 = arith.constant 0 : index
    %c0_13 = arith.constant 0 : index
    %c0_14 = arith.constant 0 : index
    %8 = vector.load %arg6[%c0_10, %c0_11, %c0_12, %c0_13, %c0_14] : memref<1x4x2x16x16xf32, #tpu.memory_space<vmem>>, vector<1x1x1x16x16xf32>
    %9 = vector.shape_cast %8 : vector<1x1x1x16x16xf32> to vector<16x16xf32>
    %c0_15 = arith.constant 0 : index
    %c1_16 = arith.constant 1 : index
    %c0_17 = arith.constant 0 : index
    %c0_18 = arith.constant 0 : index
    %c0_19 = arith.constant 0 : index
    %10 = vector.load %arg6[%c0_15, %c1_16, %c0_17, %c0_18, %c0_19] : memref<1x4x2x16x16xf32, #tpu.memory_space<vmem>>, vector<1x1x1x16x16xf32>
    %11 = vector.shape_cast %10 : vector<1x1x1x16x16xf32> to vector<16x16xf32>
    %c0_20 = arith.constant 0 : index
    %c2 = arith.constant 2 : index
    %c0_21 = arith.constant 0 : index
    %c0_22 = arith.constant 0 : index
    %c0_23 = arith.constant 0 : index
    %12 = vector.load %arg6[%c0_20, %c2, %c0_21, %c0_22, %c0_23] : memref<1x4x2x16x16xf32, #tpu.memory_space<vmem>>, vector<1x1x1x16x16xf32>
    %13 = vector.shape_cast %12 : vector<1x1x1x16x16xf32> to vector<16x16xf32>
    %c0_24 = arith.constant 0 : index
    %c3 = arith.constant 3 : index
    %c0_25 = arith.constant 0 : index
    %c0_26 = arith.constant 0 : index
    %c0_27 = arith.constant 0 : index
    %14 = vector.load %arg6[%c0_24, %c3, %c0_25, %c0_26, %c0_27] : memref<1x4x2x16x16xf32, #tpu.memory_space<vmem>>, vector<1x1x1x16x16xf32>
    %15 = vector.shape_cast %14 : vector<1x1x1x16x16xf32> to vector<16x16xf32>
    %cst = arith.constant dense<0.000000e+00> : vector<16x32xf32>
    %16 = tpu.matmul %9, %1, %cst {dimension_numbers = #tpu.dot_dimension_numbers<[1], [0], [0], [1], [0, 0, 1, 1], [], []>} : vector<16x16xf32>, vector<16x32xf32>, vector<16x32xf32> -> vector<16x32xf32>
    %cst_28 = arith.constant dense<0.000000e+00> : vector<16x32xf32>
    %17 = tpu.matmul %13, %3, %cst_28 {dimension_numbers = #tpu.dot_dimension_numbers<[1], [0], [0], [1], [0, 0, 1, 1], [], []>} : vector<16x16xf32>, vector<16x32xf32>, vector<16x32xf32> -> vector<16x32xf32>
    %18 = arith.addf %16, %17 : vector<16x32xf32>
    %c0_29 = arith.constant 0 : index
    %c0_30 = arith.constant 0 : index
    %19 = vector.load %arg8[%c0_29, %c0_30] : memref<16x32xf32, #tpu.memory_space<vmem>>, vector<16x32xf32>
    tpu.vector_store %arg8[%c0_29, %c0_30], %18 {strides = array<i32>} : memref<16x32xf32, #tpu.memory_space<vmem>>, vector<16x32xf32>,
    %cst_31 = arith.constant dense<0.000000e+00> : vector<16x32xf32>
    %20 = tpu.matmul %11, %1, %cst_31 {dimension_numbers = #tpu.dot_dimension_numbers<[1], [0], [0], [1], [0, 0, 1, 1], [], []>} : vector<16x16xf32>, vector<16x32xf32>, vector<16x32xf32> -> vector<16x32xf32>
    %cst_32 = arith.constant dense<0.000000e+00> : vector<16x32xf32>
    %21 = tpu.matmul %15, %3, %cst_32 {dimension_numbers = #tpu.dot_dimension_numbers<[1], [0], [0], [1], [0, 0, 1, 1], [], []>} : vector<16x16xf32>, vector<16x32xf32>, vector<16x32xf32> -> vector<16x32xf32>
    %22 = arith.addf %20, %21 : vector<16x32xf32>
    %c0_33 = arith.constant 0 : index
    %c0_34 = arith.constant 0 : index
    %23 = vector.load %arg9[%c0_33, %c0_34] : memref<16x32xf32, #tpu.memory_space<vmem>>, vector<16x32xf32>
    tpu.vector_store %arg9[%c0_33, %c0_34], %22 {strides = array<i32>} : memref<16x32xf32, #tpu.memory_space<vmem>>, vector<16x32xf32>,
    %c0_35 = arith.constant 0 : index
    %c0_36 = arith.constant 0 : index
    %24 = vector.load %arg8[%c0_35, %c0_36] : memref<16x32xf32, #tpu.memory_space<vmem>>, vector<16x32xf32>
    %c0_37 = arith.constant 0 : index
    %c0_38 = arith.constant 0 : index
    %25 = vector.load %arg9[%c0_37, %c0_38] : memref<16x32xf32, #tpu.memory_space<vmem>>, vector<16x32xf32>
    %cst_39 = arith.constant dense<0.000000e+00> : vector<32x32xf32>
    %26 = tpu.matmul %5, %24, %cst_39 {dimension_numbers = #tpu.dot_dimension_numbers<[1], [0], [0], [1], [0, 0, 1, 1], [], []>} : vector<32x16xf32>, vector<16x32xf32>, vector<32x32xf32> -> vector<32x32xf32>
    %cst_40 = arith.constant dense<0.000000e+00> : vector<32x32xf32>
    %27 = tpu.matmul %7, %25, %cst_40 {dimension_numbers = #tpu.dot_dimension_numbers<[1], [0], [0], [1], [0, 0, 1, 1], [], []>} : vector<32x16xf32>, vector<16x32xf32>, vector<32x32xf32> -> vector<32x32xf32>
    %28 = arith.addf %26, %27 : vector<32x32xf32>
    %cst_41 = arith.constant 0.49999997 : f32
    %29 = vector.broadcast %cst_41 : f32 to vector<32x32xf32>
    %30 = arith.mulf %29, %28 : vector<32x32xf32>
    %c0_42 = arith.constant 0 : index
    %c0_43 = arith.constant 0 : index
    %c0_44 = arith.constant 0 : index
    %c0_45 = arith.constant 0 : index
    %31 = vector.load %arg7[%c0_42, %c0_43, %c0_44, %c0_45] : memref<1x2x32x32xf32, #tpu.memory_space<vmem>>, vector<1x1x32x32xf32>
    %32 = vector.shape_cast %31 : vector<1x1x32x32xf32> to vector<32x32xf32>
    %33 = vector.shape_cast %30 : vector<32x32xf32> to vector<1x1x32x32xf32>
    tpu.vector_store %arg7[%c0_42, %c0_43, %c0_44, %c0_45], %33 {strides = array<i32>} : memref<1x2x32x32xf32, #tpu.memory_space<vmem>>, vector<1x1x32x32xf32>,
    %c0_46 = arith.constant 0 : index
    %c0_47 = arith.constant 0 : index
    %c1_48 = arith.constant 1 : index
    %c0_49 = arith.constant 0 : index
    %c0_50 = arith.constant 0 : index
    %34 = vector.load %arg6[%c0_46, %c0_47, %c1_48, %c0_49, %c0_50] : memref<1x4x2x16x16xf32, #tpu.memory_space<vmem>>, vector<1x1x1x16x16xf32>
    %35 = vector.shape_cast %34 : vector<1x1x1x16x16xf32> to vector<16x16xf32>
    %c0_51 = arith.constant 0 : index
    %c1_52 = arith.constant 1 : index
    %c1_53 = arith.constant 1 : index
    %c0_54 = arith.constant 0 : index
    %c0_55 = arith.constant 0 : index
    %36 = vector.load %arg6[%c0_51, %c1_52, %c1_53, %c0_54, %c0_55] : memref<1x4x2x16x16xf32, #tpu.memory_space<vmem>>, vector<1x1x1x16x16xf32>
    %37 = vector.shape_cast %36 : vector<1x1x1x16x16xf32> to vector<16x16xf32>
    %c0_56 = arith.constant 0 : index
    %c2_57 = arith.constant 2 : index
    %c1_58 = arith.constant 1 : index
    %c0_59 = arith.constant 0 : index
    %c0_60 = arith.constant 0 : index
    %38 = vector.load %arg6[%c0_56, %c2_57, %c1_58, %c0_59, %c0_60] : memref<1x4x2x16x16xf32, #tpu.memory_space<vmem>>, vector<1x1x1x16x16xf32>
    %39 = vector.shape_cast %38 : vector<1x1x1x16x16xf32> to vector<16x16xf32>
    %c0_61 = arith.constant 0 : index
    %c3_62 = arith.constant 3 : index
    %c1_63 = arith.constant 1 : index
    %c0_64 = arith.constant 0 : index
    %c0_65 = arith.constant 0 : index
    %40 = vector.load %arg6[%c0_61, %c3_62, %c1_63, %c0_64, %c0_65] : memref<1x4x2x16x16xf32, #tpu.memory_space<vmem>>, vector<1x1x1x16x16xf32>
    %41 = vector.shape_cast %40 : vector<1x1x1x16x16xf32> to vector<16x16xf32>
    %cst_66 = arith.constant dense<0.000000e+00> : vector<16x32xf32>
    %42 = tpu.matmul %35, %1, %cst_66 {dimension_numbers = #tpu.dot_dimension_numbers<[1], [0], [0], [1], [0, 0, 1, 1], [], []>} : vector<16x16xf32>, vector<16x32xf32>, vector<16x32xf32> -> vector<16x32xf32>
    %cst_67 = arith.constant dense<0.000000e+00> : vector<16x32xf32>
    %43 = tpu.matmul %39, %3, %cst_67 {dimension_numbers = #tpu.dot_dimension_numbers<[1], [0], [0], [1], [0, 0, 1, 1], [], []>} : vector<16x16xf32>, vector<16x32xf32>, vector<16x32xf32> -> vector<16x32xf32>
    %44 = arith.addf %42, %43 : vector<16x32xf32>
    %c0_68 = arith.constant 0 : index
    %c0_69 = arith.constant 0 : index
    %45 = vector.load %arg8[%c0_68, %c0_69] : memref<16x32xf32, #tpu.memory_space<vmem>>, vector<16x32xf32>
    tpu.vector_store %arg8[%c0_68, %c0_69], %44 {strides = array<i32>} : memref<16x32xf32, #tpu.memory_space<vmem>>, vector<16x32xf32>,
    %cst_70 = arith.constant dense<0.000000e+00> : vector<16x32xf32>
    %46 = tpu.matmul %37, %1, %cst_70 {dimension_numbers = #tpu.dot_dimension_numbers<[1], [0], [0], [1], [0, 0, 1, 1], [], []>} : vector<16x16xf32>, vector<16x32xf32>, vector<16x32xf32> -> vector<16x32xf32>
    %cst_71 = arith.constant dense<0.000000e+00> : vector<16x32xf32>
    %47 = tpu.matmul %41, %3, %cst_71 {dimension_numbers = #tpu.dot_dimension_numbers<[1], [0], [0], [1], [0, 0, 1, 1], [], []>} : vector<16x16xf32>, vector<16x32xf32>, vector<16x32xf32> -> vector<16x32xf32>
    %48 = arith.addf %46, %47 : vector<16x32xf32>
    %c0_72 = arith.constant 0 : index
    %c0_73 = arith.constant 0 : index
    %49 = vector.load %arg9[%c0_72, %c0_73] : memref<16x32xf32, #tpu.memory_space<vmem>>, vector<16x32xf32>
    tpu.vector_store %arg9[%c0_72, %c0_73], %48 {strides = array<i32>} : memref<16x32xf32, #tpu.memory_space<vmem>>, vector<16x32xf32>,
    %c0_74 = arith.constant 0 : index
    %c0_75 = arith.constant 0 : index
    %50 = vector.load %arg8[%c0_74, %c0_75] : memref<16x32xf32, #tpu.memory_space<vmem>>, vector<16x32xf32>
    %c0_76 = arith.constant 0 : index
    %c0_77 = arith.constant 0 : index
    %51 = vector.load %arg9[%c0_76, %c0_77] : memref<16x32xf32, #tpu.memory_space<vmem>>, vector<16x32xf32>
    %cst_78 = arith.constant dense<0.000000e+00> : vector<32x32xf32>
    %52 = tpu.matmul %5, %50, %cst_78 {dimension_numbers = #tpu.dot_dimension_numbers<[1], [0], [0], [1], [0, 0, 1, 1], [], []>} : vector<32x16xf32>, vector<16x32xf32>, vector<32x32xf32> -> vector<32x32xf32>
    %cst_79 = arith.constant dense<0.000000e+00> : vector<32x32xf32>
    %53 = tpu.matmul %7, %51, %cst_79 {dimension_numbers = #tpu.dot_dimension_numbers<[1], [0], [0], [1], [0, 0, 1, 1], [], []>} : vector<32x16xf32>, vector<16x32xf32>, vector<32x32xf32> -> vector<32x32xf32>
    %54 = arith.addf %52, %53 : vector<32x32xf32>
    %cst_80 = arith.constant 0.49999997 : f32
    %55 = vector.broadcast %cst_80 : f32 to vector<32x32xf32>
    %56 = arith.mulf %55, %54 : vector<32x32xf32>
    %c0_81 = arith.constant 0 : index
    %c1_82 = arith.constant 1 : index
    %c0_83 = arith.constant 0 : index
    %c0_84 = arith.constant 0 : index
    %57 = vector.load %arg7[%c0_81, %c1_82, %c0_83, %c0_84] : memref<1x2x32x32xf32, #tpu.memory_space<vmem>>, vector<1x1x32x32xf32>
    %58 = vector.shape_cast %57 : vector<1x1x32x32xf32> to vector<32x32xf32>
    %59 = vector.shape_cast %56 : vector<32x32xf32> to vector<1x1x32x32xf32>
    tpu.vector_store %arg7[%c0_81, %c1_82, %c0_83, %c0_84], %59 {strides = array<i32>} : memref<1x2x32x32xf32, #tpu.memory_space<vmem>>, vector<1x1x32x32xf32>,
    return
  }
  func.func @transform_0(%arg0: i32, %arg1: i32, %arg2: i32, %arg3: i32) -> (i32, i32, i32) {
    %c0_i32 = arith.constant 0 : i32
    %c0_i32_0 = arith.constant 0 : i32
    %c0_i32_1 = arith.constant 0 : i32
    %c0_i32_2 = arith.constant 0 : i32
    return %c0_i32, %c0_i32_0, %c0_i32_1 : i32, i32, i32
  }
  func.func @transform_1(%arg0: i32, %arg1: i32, %arg2: i32, %arg3: i32) -> (i32, i32, i32) {
    %c0_i32 = arith.constant 0 : i32
    %c0_i32_0 = arith.constant 0 : i32
    %c0_i32_1 = arith.constant 0 : i32
    %c0_i32_2 = arith.constant 0 : i32
    return %c0_i32, %c0_i32_0, %c0_i32_1 : i32, i32, i32
  }
  func.func @transform_2(%arg0: i32, %arg1: i32, %arg2: i32, %arg3: i32) -> (i32, i32, i32, i32, i32) {
    %c0_i32 = arith.constant 0 : i32
    %c0_i32_0 = arith.constant 0 : i32
    return %arg0, %c0_i32, %arg1, %arg2, %arg3 : i32, i32, i32, i32, i32
  }
  func.func @transform_3(%arg0: i32, %arg1: i32, %arg2: i32, %arg3: i32) -> (i32, i32, i32, i32) {
    %c0_i32 = arith.constant 0 : i32
    return %arg0, %arg1, %arg2, %arg3 : i32, i32, i32, i32
  }
}

</mosaic_0001>

<llo_original>
// kernel: _lambda_.1
$region0: #{_lambda_.1}
  #allocation0 [shape = 'u32[]', space=smem, size = 0x4, offset = 0x4, fixed_abs, tag = 'smem constant byte address 0x4 - core index']
  #allocation1 [shape = 'u32[72,128]{1,0:T(1,128)}', space=vmem, size = 0x9000, scoped, tag = 'internal scratch']
  #allocation2 [shape = 'f32[16,32]{1,0:T(8,128)}', space=vmem, size = 0x2000, scoped, tag = 'scratch operand']
  #allocation3 [shape = 'f32[16,32]{1,0:T(8,128)}', space=vmem, size = 0x2000, scoped, tag = 'scratch operand']
  %s0 = inlined_call_operand.vmem [shape: f32[2,16,32], index: 0, kind: input, shape index: {}]
  %s1 = inlined_call_operand.vmem [shape: f32[2,32,16], index: 1, kind: input, shape index: {}]
  %s2 = inlined_call_operand.vmem [shape: f32[2,4,2,16,16], index: 2, kind: input, shape index: {}]
  %s3 = inlined_call_operand.hbm [shape: f32[2,2,32,32], index: 3, kind: output, shape index: {}]
  %s4 = sld [smem:[#allocation0]]
  $region45: #{_lambda_.1} parent=0
    _
  %s6 = ssub.s32 1, %s4
  %s7 = scalar_select 0, %s6, %s4
  $region1: #{_lambda_.1} parent=0
    #allocation4 [shape = 'u8[65536]{0}', space=vmem, size = 0x10000, scoped, tag = 'output window, operand 0']
    #allocation5 [shape = 's32[2]{0}', space=sflag, size = 0x8, scoped, tag = 'scoped memory for _lambda_.1']
    %8 = vsyncpa [#allocation5], 0
    %s9 = scalar_lea.sflag [#allocation5], 1
    %10 = vsyncpa %s9, 0
    loop: start=0, step=1, limit=4
    $region2: #{_lambda_.1} parent=1 // loop_pre_header
      _
    $region3: #{_lambda_.1} parent=1 // loop_header
      %s12 = sphi 0, %s16
      %p13 = scmp.ge.s32.totalorder %s12, 4
      %s19 = sphi 0, %s45
      %s20 = sphi 0, %s41
      %s21 = sphi 0, %s37
      %s22 = sphi 0, %s33
      %s23 = sphi 0, %s19
      %s24 = sphi 0, %s20
      %s25 = sphi 0, %s21
      %s26 = sphi 0, %s22
      %s27 = sphi 0, %s23
      %s28 = sphi 0, %s24
      %s29 = sphi 0, %s25
      %s30 = sphi 0, %s26
      %s46 = sphi 0, %s46
      %s48 = sphi 0, %s46
      %s49 = sphi 0, %s48
      %s63 = sphi 0, %s49
      %s67 = sphi 0, %s67
      %s69 = sphi 0, %s67
      %s70 = sphi 0, %s69
      %s84 = sphi 0, %s70
      %s96 = sphi 0, %s98
      %s99 = sphi 0, %s96
      %s100 = sphi 0, %s99
      %s116 = sphi 0, %s100
      %s128 = sphi 0, %s130
      %s131 = sphi 0, %s128
      %s132 = sphi 0, %s131
      %s148 = sphi 0, %s132
    $region4: #{_lambda_.1} parent=1 // loop_header_branch
      %15 = sbr.rel (%p13) target = $region8
    $region5: #{_lambda_.1} parent=1 // loop_body
      %s17 = ssub.s32 %s12, 1
      %s18 = ssub.s32 %s12, 2
      %s31 = sadd.s32 1, %s22
      %p32 = scmp.ge.s32.totalorder %s31, 1
      %s33 = scalar_select %p32, 0, %s31
      %s34 = sadd.s32 1, %s21
      %s35 = scalar_select %p32, %s34, %s21
      %p36 = scmp.ge.s32.totalorder %s35, 1
      %s37 = scalar_select %p36, 0, %s35
      %s38 = sadd.s32 1, %s20
      %s39 = scalar_select %p36, %s38, %s20
      %p40 = scmp.ge.s32.totalorder %s39, 1
      %s41 = scalar_select %p40, 0, %s39
      %s42 = sadd.s32 1, %s19
      %s43 = scalar_select %p40, %s42, %s19
      %p44 = scmp.ge.s32.totalorder %s43, 2
      %s45 = scalar_select %p44, 0, %s43
      %s47 = sadd.s32 %s46, 1
      %p50 = scmp.eq.s32.totalorder %s12, 1
      %p51 = scmp.ne.s32.totalorder %s46, %s48
      %p52 = scmp.eq.s32.totalorder %s12, 0
      %p53 = por %p51, %p52
      %p54 = scmp.ne.s32.totalorder %s46, %s48
      %p55 = scmp.eq.s32.totalorder %s17, 1
      %p56 = por %p54, %p55
      %p57 = scmp.ne.s32.totalorder %s48, %s49
      %p58 = scmp.eq.s32.totalorder %s17, 0
      %p59 = por %p57, %p58
      %p60 = scmp.ne.s32.totalorder %s48, %s49
      %p61 = scmp.eq.s32.totalorder %s18, 1
      %p62 = por %p60, %p61
      %p64 = scmp.ne.s32.totalorder %s49, %s63
      %p65 = scmp.eq.s32.totalorder %s18, 0
      %p66 = por %p64, %p65
      %s68 = sadd.s32 %s67, 1
      %p71 = scmp.eq.s32.totalorder %s12, 1
      %p72 = scmp.ne.s32.totalorder %s67, %s69
      %p73 = scmp.eq.s32.totalorder %s12, 0
      %p74 = por %p72, %p73
      %p75 = scmp.ne.s32.totalorder %s67, %s69
      %p76 = scmp.eq.s32.totalorder %s17, 1
      %p77 = por %p75, %p76
      %p78 = scmp.ne.s32.totalorder %s69, %s70
      %p79 = scmp.eq.s32.totalorder %s17, 0
      %p80 = por %p78, %p79
      %p81 = scmp.ne.s32.totalorder %s69, %s70
      %p82 = scmp.eq.s32.totalorder %s18, 1
      %p83 = por %p81, %p82
      %p85 = scmp.ne.s32.totalorder %s70, %s84
      %p86 = scmp.eq.s32.totalorder %s18, 0
      %p87 = por %p85, %p86
      %s88 = ssub.s32 %s19, %s45
      %s89 = ssub.s32 %s20, %s41
      %s90 = sor.u32 %s88, %s89
      %s91 = ssub.s32 %s21, %s37
      %s92 = sor.u32 %s90, %s91
      %s93 = ssub.s32 %s22, %s33
      %s94 = sor.u32 %s92, %s93
      %p95 = scmp.eq.s32.totalorder %s94, 0
      %s97 = sadd.s32 %s96, 1
      %s98 = scalar_select %p95, %s96, %s97
      %p101 = pneg %p95
      %p102 = scmp.eq.s32.totalorder %s12, 1
      %p103 = por %p101, %p102
      %p104 = scmp.ne.s32.totalorder %s96, %s99
      %p105 = scmp.eq.s32.totalorder %s12, 0
      %p106 = por %p104, %p105
      %p107 = scmp.ne.s32.totalorder %s96, %s99
      %p108 = scmp.eq.s32.totalorder %s17, 1
      %p109 = por %p107, %p108
      %p110 = scmp.ne.s32.totalorder %s99, %s100
      %p111 = scmp.eq.s32.totalorder %s17, 0
      %p112 = por %p110, %p111
      %p113 = scmp.ne.s32.totalorder %s99, %s100
      %p114 = scmp.eq.s32.totalorder %s18, 1
      %p115 = por %p113, %p114
      %p117 = scmp.ne.s32.totalorder %s100, %s116
      %p118 = scmp.eq.s32.totalorder %s18, 0
      %p119 = por %p117, %p118
      %s120 = ssub.s32 %s19, %s45
      %s121 = ssub.s32 %s20, %s41
      %s122 = sor.u32 %s120, %s121
      %s123 = ssub.s32 %s21, %s37
      %s124 = sor.u32 %s122, %s123
      %s125 = ssub.s32 %s22, %s33
      %s126 = sor.u32 %s124, %s125
      %p127 = scmp.eq.s32.totalorder %s126, 0
      %s129 = sadd.s32 %s128, 1
      %s130 = scalar_select %p127, %s128, %s129
      %p133 = pneg %p127
      %p134 = scmp.eq.s32.totalorder %s12, 1
      %p135 = por %p133, %p134
      %p136 = scmp.ne.s32.totalorder %s128, %s131
      %p137 = scmp.eq.s32.totalorder %s12, 0
      %p138 = por %p136, %p137
      %p139 = scmp.ne.s32.totalorder %s128, %s131
      %p140 = scmp.eq.s32.totalorder %s17, 1
      %p141 = por %p139, %p140
      %p142 = scmp.ne.s32.totalorder %s131, %s132
      %p143 = scmp.eq.s32.totalorder %s17, 0
      %p144 = por %p142, %p143
      %p145 = scmp.ne.s32.totalorder %s131, %s132
      %p146 = scmp.eq.s32.totalorder %s18, 1
      %p147 = por %p145, %p146
      %p149 = scmp.ne.s32.totalorder %s132, %s148
      %p150 = scmp.eq.s32.totalorder %s18, 0
      %p151 = por %p149, %p150
      %p152 = scmp.le.s32.totalorder 1, %s12
      %p153 = scmp.lt.s32.totalorder %s12, 3
      %p154 = pnand %p152, %p153
      %p155 = pneg %p154
      // Predicated region
      $region9: #{_lambda_.1} parent=5 // pred_check
        _
      $region10: #{_lambda_.1} parent=5 // pred_check_branch
        %157 = sbr.rel (%p154) target = $region12
      $region11: #{_lambda_.1} parent=5 // pred_region
        %s158 = ssub.s32 %s12, 1
        // Predicated region
        $region13: #{_lambda_.1} parent=11 // pred_check
          %p159 = pneg %p59
        $region14: #{_lambda_.1} parent=11 // pred_check_branch
          %161 = sbr.rel (%p159) target = $region16
        $region15: #{_lambda_.1} parent=11 // pred_region
          _
        $region16: #{_lambda_.1} parent=11 // pred_fallthru
          _
        // Predicated region
        $region17: #{_lambda_.1} parent=11 // pred_check
          %p162 = pneg %p80
        $region18: #{_lambda_.1} parent=11 // pred_check_branch
          %164 = sbr.rel (%p162) target = $region20
        $region19: #{_lambda_.1} parent=11 // pred_region
          _
        $region20: #{_lambda_.1} parent=11 // pred_fallthru
          _
      $region12: #{_lambda_.1} parent=5 // pred_fallthru
        _
      %p165 = scmp.lt.s32.totalorder %s12, 2
      // Predicated region
      $region21: #{_lambda_.1} parent=5 // pred_check
        %p166 = pneg %p165
      $region22: #{_lambda_.1} parent=5 // pred_check_branch
        %168 = sbr.rel (%p166) target = $region24
      $region23: #{_lambda_.1} parent=5 // pred_region
        // Predicated region
        $region25: #{_lambda_.1} parent=23 // pred_check
          %p169 = pneg %p106
        $region26: #{_lambda_.1} parent=23 // pred_check_branch
          %171 = sbr.rel (%p169) target = $region28
        $region27: #{_lambda_.1} parent=23 // pred_region
          %s172 = smul.u32 2, %s20
          %s173 = smul.u32 2, %s21
          %p174 = scmp.lt.s32.totalorder %s19, 1
          %s175 = scalar_select %p174, %s19, 1
          %p176 = scmp.lt.s32.totalorder %s172, 1
          %s177 = scalar_select %p176, %s172, 1
          %p178 = scmp.lt.s32.totalorder %s173, 1
          %s179 = scalar_select %p178, %s173, 1
          %p180 = scmp.lt.s32.totalorder %s22, 0
          %s181 = scalar_select %p180, %s22, 0
          %s182 = sadd.s32 %s181, %s179
          %s183 = smul.addr %s177, 2
          %s184 = sadd.s32 %s182, %s183
          %s185 = smul.addr %s175, 16
          %s186 = sadd.s32 %s184, %s185
          %s187 = smul.addr %s186, 8
          %s188 = scalar_lea.vmem %s2, %s187
          %s189 = smul.u32 2, %s20
          %s190 = smul.u32 2, %s21
        $region28: #{_lambda_.1} parent=23 // pred_fallthru
          _
      $region24: #{_lambda_.1} parent=5 // pred_fallthru
        _
      %p191 = scmp.le.s32.totalorder 1, %s12
      %p192 = scmp.lt.s32.totalorder %s12, 3
      %p193 = pnand %p191, %p192
      %p194 = pneg %p193
      // Predicated region
      $region29: #{_lambda_.1} parent=5 // pred_check
        _
      $region30: #{_lambda_.1} parent=5 // pred_check_branch
        %196 = sbr.rel (%p193) target = $region32
      $region31: #{_lambda_.1} parent=5 // pred_region
        %s197 = ssub.s32 %s12, 1
        %p198 = pneg %p59
        %p199 = pneg %p56
        %p200 = pneg %p80
        %p201 = pneg %p77
        %s202 = smul.u32 2, %s24
        %s203 = smul.u32 2, %s25
        %p204 = scmp.lt.s32.totalorder %s23, 1
        %s205 = scalar_select %p204, %s23, 1
        %p206 = scmp.lt.s32.totalorder %s202, 1
        %s207 = scalar_select %p206, %s202, 1
        %p208 = scmp.lt.s32.totalorder %s203, 1
        %s209 = scalar_select %p208, %s203, 1
        %p210 = scmp.lt.s32.totalorder %s26, 0
        %s211 = scalar_select %p210, %s26, 0
        %s212 = sadd.s32 %s211, %s209
        %s213 = smul.addr %s207, 2
        %s214 = sadd.s32 %s212, %s213
        %s215 = smul.addr %s205, 16
        %s216 = sadd.s32 %s214, %s215
        %s217 = smul.addr %s216, 8
        %s218 = scalar_lea.vmem %s2, %s217
        %p219 = pneg %p112
        %p220 = pneg %p109
        %p221 = pneg %p144
        %p222 = pneg %p141
        %s223 = sand.u32 %s131, 1
        %s224 = scalar_lea.sflag [#allocation5], %s223
        %s225 = sand.u32 %s131, 1
        %s226 = smul.addr %s225, 64
        %s227 = scalar_lea.vmem [#allocation4], %s226
        %s228 = smul.u32 2, %s24
        %s229 = smul.u32 2, %s25
        %p230 = scmp.lt.s32.totalorder %s23, 1
        %s231 = scalar_select %p230, %s23, 1
        %p232 = scmp.lt.s32.totalorder %s228, 1
        %s233 = scalar_select %p232, %s228, 1
        %p234 = scmp.lt.s32.totalorder %s229, 1
        %s235 = scalar_select %p234, %s229, 1
        %p236 = scmp.lt.s32.totalorder %s26, 0
        %s237 = scalar_select %p236, %s26, 0
        %s238 = sadd.s32 %s237, %s235
        %s239 = smul.addr %s233, 2
        %s240 = sadd.s32 %s238, %s239
        %s241 = smul.addr %s231, 16
        %s242 = sadd.s32 %s240, %s241
        %s243 = smul.addr %s242, 8
        %s244 = scalar_lea.vmem %s2, %s243
        %s245 = smul.u32 2, %s24
        %s246 = smul.u32 2, %s25
        %s247 = smul.u32 2, %s24
        %s248 = smul.u32 4, %s25
        %v249 = vld [vmem:[%s0] sm:$0xff]
        %v250 = vld [vmem:[%s0 + $0x8] sm:$0xff]
        %s251 = scalar_lea.vmem %s0, 16
        %v252 = vld [vmem:[%s251] sm:$0xff]
        %v253 = vld [vmem:[%s251 + $0x8] sm:$0xff]
        %v254 = vld [vmem:[%s1] sm:$0xff]
        %v255 = vld [vmem:[%s1 + $0x8] sm:$0xff]
        %v256 = vld [vmem:[%s1 + $0x10] sm:$0xff]
        %v257 = vld [vmem:[%s1 + $0x18] sm:$0xff]
        %s258 = scalar_lea.vmem %s1, 32
        %v259 = vld [vmem:[%s258] sm:$0xff]
        %v260 = vld [vmem:[%s258 + $0x8] sm:$0xff]
        %v261 = vld [vmem:[%s258 + $0x10] sm:$0xff]
        %v262 = vld [vmem:[%s258 + $0x18] sm:$0xff]
        %v263 = vld [vmem:[%s244] sm:$0xff]
        %v264 = vld [vmem:[%s244 + $0x8] sm:$0xff]
        %s265 = scalar_lea.vmem %s244, 32
        %v266 = vld [vmem:[%s265] sm:$0xff]
        %v267 = vld [vmem:[%s265 + $0x8] sm:$0xff]
        %s268 = scalar_lea.vmem %s244, 64
        %v269 = vld [vmem:[%s268] sm:$0xff]
        %v270 = vld [vmem:[%s268 + $0x8] sm:$0xff]
        %s271 = scalar_lea.vmem %s244, 96
        %v272 = vld [vmem:[%s271] sm:$0xff]
        %v273 = vld [vmem:[%s271 + $0x8] sm:$0xff]
        %vm274 = vcmask 130048
        %v276 = vsel %vm274, %v269, 0
        %v279 = vsel %vm274, %v270, 0
        %281 = vmatpush.msra.mxu0 0.0
        %282 = vmatpush.msra.mxu0 0.0
        %283 = vmatpush.msra.mxu0 0.0
        %284 = vmatpush.msra.mxu0 0.0
        %285 = vmatpush.msra.mxu0 0.0
        %286 = vmatpush.msra.mxu0 0.0
        %287 = vmatpush.msra.mxu0 0.0
        %288 = vmatpush.msra.mxu0 0.0
        %289 = vmatpush.msra.mxu0 0.0
        %290 = vmatpush.msra.mxu0 0.0
        %291 = vmatpush.msra.mxu0 0.0
        %292 = vmatpush.msra.mxu0 0.0
        %293 = vmatpush.msra.mxu0 0.0
        %294 = vmatpush.msra.mxu0 0.0
        %295 = vmatpush.msra.mxu0 %v253
        %296 = vmatpush.msra.mxu0 %v252
        %297 = vmatmul.f32.gmra.mxu0 %v276
        %v298 = vpop.f32.mrf.mxu0
        %v299 = vadd.f32 0.0, %v298
        %300 = vmatmul.f32.gmra.mxu0 %v279
        %v301 = vpop.f32.mrf.mxu0
        %v302 = vadd.f32 0.0, %v301
        %303 = vdwg.mxu0
        %v305 = vsel %vm274, %v263, 0
        %v308 = vsel %vm274, %v264, 0
        %310 = vmatpush.msra.mxu0 0.0
        %311 = vmatpush.msra.mxu0 0.0
        %312 = vmatpush.msra.mxu0 0.0
        %313 = vmatpush.msra.mxu0 0.0
        %314 = vmatpush.msra.mxu0 0.0
        %315 = vmatpush.msra.mxu0 0.0
        %316 = vmatpush.msra.mxu0 0.0
        %317 = vmatpush.msra.mxu0 0.0
        %318 = vmatpush.msra.mxu0 0.0
        %319 = vmatpush.msra.mxu0 0.0
        %320 = vmatpush.msra.mxu0 0.0
        %321 = vmatpush.msra.mxu0 0.0
        %322 = vmatpush.msra.mxu0 0.0
        %323 = vmatpush.msra.mxu0 0.0
        %324 = vmatpush.msra.mxu0 %v250
        %325 = vmatpush.msra.mxu0 %v249
        %326 = vmatmul.f32.gmra.mxu0 %v305
        %v327 = vpop.f32.mrf.mxu0
        %v328 = vadd.f32 %v299, %v327
        %329 = vmatmul.f32.gmra.mxu0 %v308
        %v330 = vpop.f32.mrf.mxu0
        %v331 = vadd.f32 %v302, %v330
        %332 = vdwg.mxu0
        %vm333 = vcmask 261120
        %334 = vst.msk [vmem:[#allocation2] sm:$0xff] %vm333, %v328
        %335 = vst.msk [vmem:[#allocation2 + $0x8] sm:$0xff] %vm333, %v331
        %v337 = vsel %vm274, %v272, 0
        %v340 = vsel %vm274, %v273, 0
        %342 = vmatpush.msra.mxu0 0.0
        %343 = vmatpush.msra.mxu0 0.0
        %344 = vmatpush.msra.mxu0 0.0
        %345 = vmatpush.msra.mxu0 0.0
        %346 = vmatpush.msra.mxu0 0.0
        %347 = vmatpush.msra.mxu0 0.0
        %348 = vmatpush.msra.mxu0 0.0
        %349 = vmatpush.msra.mxu0 0.0
        %350 = vmatpush.msra.mxu0 0.0
        %351 = vmatpush.msra.mxu0 0.0
        %352 = vmatpush.msra.mxu0 0.0
        %353 = vmatpush.msra.mxu0 0.0
        %354 = vmatpush.msra.mxu0 0.0
        %355 = vmatpush.msra.mxu0 0.0
        %356 = vmatpush.msra.mxu0 %v253
        %357 = vmatpush.msra.mxu0 %v252
        %358 = vmatmul.f32.gmra.mxu0 %v337
        %v359 = vpop.f32.mrf.mxu0
        %v360 = vadd.f32 0.0, %v359
        %361 = vmatmul.f32.gmra.mxu0 %v340
        %v362 = vpop.f32.mrf.mxu0
        %v363 = vadd.f32 0.0, %v362
        %364 = vdwg.mxu0
        %v366 = vsel %vm274, %v266, 0
        %v369 = vsel %vm274, %v267, 0
        %371 = vmatpush.msra.mxu0 0.0
        %372 = vmatpush.msra.mxu0 0.0
        %373 = vmatpush.msra.mxu0 0.0
        %374 = vmatpush.msra.mxu0 0.0
        %375 = vmatpush.msra.mxu0 0.0
        %376 = vmatpush.msra.mxu0 0.0
        %377 = vmatpush.msra.mxu0 0.0
        %378 = vmatpush.msra.mxu0 0.0
        %379 = vmatpush.msra.mxu0 0.0
        %380 = vmatpush.msra.mxu0 0.0
        %381 = vmatpush.msra.mxu0 0.0
        %382 = vmatpush.msra.mxu0 0.0
        %383 = vmatpush.msra.mxu0 0.0
        %384 = vmatpush.msra.mxu0 0.0
        %385 = vmatpush.msra.mxu0 %v250
        %386 = vmatpush.msra.mxu0 %v249
        %387 = vmatmul.f32.gmra.mxu0 %v366
        %v388 = vpop.f32.mrf.mxu0
        %v389 = vadd.f32 %v360, %v388
        %390 = vmatmul.f32.gmra.mxu0 %v369
        %v391 = vpop.f32.mrf.mxu0
        %v392 = vadd.f32 %v363, %v391
        %393 = vdwg.mxu0
        %394 = vst.msk [vmem:[#allocation3] sm:$0xff] %vm333, %v389
        %395 = vst.msk [vmem:[#allocation3 + $0x8] sm:$0xff] %vm333, %v392
        %v396 = vld [vmem:[#allocation2] sm:$0xff]
        %v397 = vld [vmem:[#allocation2 + $0x8] sm:$0xff]
        %v398 = vld [vmem:[#allocation3] sm:$0xff]
        %v399 = vld [vmem:[#allocation3 + $0x8] sm:$0xff]
        %v401 = vsel %vm274, %v259, 0
        %v404 = vsel %vm274, %v260, 0
        %v407 = vsel %vm274, %v261, 0
        %v410 = vsel %vm274, %v262, 0
        %412 = vmatpush.msra.mxu0 0.0
        %413 = vmatpush.msra.mxu0 0.0
        %414 = vmatpush.msra.mxu0 0.0
        %415 = vmatpush.msra.mxu0 0.0
        %416 = vmatpush.msra.mxu0 0.0
        %417 = vmatpush.msra.mxu0 0.0
        %418 = vmatpush.msra.mxu0 0.0
        %419 = vmatpush.msra.mxu0 0.0
        %420 = vmatpush.msra.mxu0 0.0
        %421 = vmatpush.msra.mxu0 0.0
        %422 = vmatpush.msra.mxu0 0.0
        %423 = vmatpush.msra.mxu0 0.0
        %424 = vmatpush.msra.mxu0 0.0
        %425 = vmatpush.msra.mxu0 0.0
        %426 = vmatpush.msra.mxu0 %v399
        %427 = vmatpush.msra.mxu0 %v398
        %428 = vmatmul.f32.gmra.mxu0 %v401
        %v429 = vpop.f32.mrf.mxu0
        %v430 = vadd.f32 0.0, %v429
        %431 = vmatmul.f32.gmra.mxu0 %v404
        %v432 = vpop.f32.mrf.mxu0
        %v433 = vadd.f32 0.0, %v432
        %434 = vmatmul.f32.gmra.mxu0 %v407
        %v435 = vpop.f32.mrf.mxu0
        %v436 = vadd.f32 0.0, %v435
        %437 = vmatmul.f32.gmra.mxu0 %v410
        %v438 = vpop.f32.mrf.mxu0
        %v439 = vadd.f32 0.0, %v438
        %440 = vdwg.mxu0
        %v442 = vsel %vm274, %v254, 0
        %v445 = vsel %vm274, %v255, 0
        %v448 = vsel %vm274, %v256, 0
        %v451 = vsel %vm274, %v257, 0
        %453 = vmatpush.msra.mxu0 0.0
        %454 = vmatpush.msra.mxu0 0.0
        %455 = vmatpush.msra.mxu0 0.0
        %456 = vmatpush.msra.mxu0 0.0
        %457 = vmatpush.msra.mxu0 0.0
        %458 = vmatpush.msra.mxu0 0.0
        %459 = vmatpush.msra.mxu0 0.0
        %460 = vmatpush.msra.mxu0 0.0
        %461 = vmatpush.msra.mxu0 0.0
        %462 = vmatpush.msra.mxu0 0.0
        %463 = vmatpush.msra.mxu0 0.0
        %464 = vmatpush.msra.mxu0 0.0
        %465 = vmatpush.msra.mxu0 0.0
        %466 = vmatpush.msra.mxu0 0.0
        %467 = vmatpush.msra.mxu0 %v397
        %468 = vmatpush.msra.mxu0 %v396
        %469 = vmatmul.f32.gmra.mxu0 %v442
        %v470 = vpop.f32.mrf.mxu0
        %v471 = vadd.f32 %v430, %v470
        %472 = vmatmul.f32.gmra.mxu0 %v445
        %v473 = vpop.f32.mrf.mxu0
        %v474 = vadd.f32 %v433, %v473
        %475 = vmatmul.f32.gmra.mxu0 %v448
        %v476 = vpop.f32.mrf.mxu0
        %v477 = vadd.f32 %v436, %v476
        %478 = vmatmul.f32.gmra.mxu0 %v451
        %v479 = vpop.f32.mrf.mxu0
        %v480 = vadd.f32 %v439, %v479
        %481 = vdwg.mxu0
        %v482 = vmul.f32 %v471, 0.49999997
        %v483 = vmul.f32 %v474, 0.49999997
        %v484 = vmul.f32 %v477, 0.49999997
        %v485 = vmul.f32 %v480, 0.49999997
        %486 = vst.msk [vmem:[%s227] sm:$0xff] %vm333, %v482
        %487 = vst.msk [vmem:[%s227 + $0x8] sm:$0xff] %vm333, %v483
        %488 = vst.msk [vmem:[%s227 + $0x10] sm:$0xff] %vm333, %v484
        %489 = vst.msk [vmem:[%s227 + $0x18] sm:$0xff] %vm333, %v485
        %s490 = scalar_lea.vmem %s244, 16
        %v491 = vld [vmem:[%s490] sm:$0xff]
        %v492 = vld [vmem:[%s490 + $0x8] sm:$0xff]
        %s493 = scalar_lea.vmem %s244, 48
        %v494 = vld [vmem:[%s493] sm:$0xff]
        %v495 = vld [vmem:[%s493 + $0x8] sm:$0xff]
        %s496 = scalar_lea.vmem %s244, 80
        %v497 = vld [vmem:[%s496] sm:$0xff]
        %v498 = vld [vmem:[%s496 + $0x8] sm:$0xff]
        %s499 = scalar_lea.vmem %s244, 112
        %v500 = vld [vmem:[%s499] sm:$0xff]
        %v501 = vld [vmem:[%s499 + $0x8] sm:$0xff]
        %v503 = vsel %vm274, %v497, 0
        %v506 = vsel %vm274, %v498, 0
        %508 = vmatpush.msra.mxu0 0.0
        %509 = vmatpush.msra.mxu0 0.0
        %510 = vmatpush.msra.mxu0 0.0
        %511 = vmatpush.msra.mxu0 0.0
        %512 = vmatpush.msra.mxu0 0.0
        %513 = vmatpush.msra.mxu0 0.0
        %514 = vmatpush.msra.mxu0 0.0
        %515 = vmatpush.msra.mxu0 0.0
        %516 = vmatpush.msra.mxu0 0.0
        %517 = vmatpush.msra.mxu0 0.0
        %518 = vmatpush.msra.mxu0 0.0
        %519 = vmatpush.msra.mxu0 0.0
        %520 = vmatpush.msra.mxu0 0.0
        %521 = vmatpush.msra.mxu0 0.0
        %522 = vmatpush.msra.mxu0 %v253
        %523 = vmatpush.msra.mxu0 %v252
        %524 = vmatmul.f32.gmra.mxu0 %v503
        %v525 = vpop.f32.mrf.mxu0
        %v526 = vadd.f32 0.0, %v525
        %527 = vmatmul.f32.gmra.mxu0 %v506
        %v528 = vpop.f32.mrf.mxu0
        %v529 = vadd.f32 0.0, %v528
        %530 = vdwg.mxu0
        %v532 = vsel %vm274, %v491, 0
        %v535 = vsel %vm274, %v492, 0
        %537 = vmatpush.msra.mxu0 0.0
        %538 = vmatpush.msra.mxu0 0.0
        %539 = vmatpush.msra.mxu0 0.0
        %540 = vmatpush.msra.mxu0 0.0
        %541 = vmatpush.msra.mxu0 0.0
        %542 = vmatpush.msra.mxu0 0.0
        %543 = vmatpush.msra.mxu0 0.0
        %544 = vmatpush.msra.mxu0 0.0
        %545 = vmatpush.msra.mxu0 0.0
        %546 = vmatpush.msra.mxu0 0.0
        %547 = vmatpush.msra.mxu0 0.0
        %548 = vmatpush.msra.mxu0 0.0
        %549 = vmatpush.msra.mxu0 0.0
        %550 = vmatpush.msra.mxu0 0.0
        %551 = vmatpush.msra.mxu0 %v250
        %552 = vmatpush.msra.mxu0 %v249
        %553 = vmatmul.f32.gmra.mxu0 %v532
        %v554 = vpop.f32.mrf.mxu0
        %v555 = vadd.f32 %v526, %v554
        %556 = vmatmul.f32.gmra.mxu0 %v535
        %v557 = vpop.f32.mrf.mxu0
        %v558 = vadd.f32 %v529, %v557
        %559 = vdwg.mxu0
        %560 = vst.msk [vmem:[#allocation2] sm:$0xff] %vm333, %v555
        %561 = vst.msk [vmem:[#allocation2 + $0x8] sm:$0xff] %vm333, %v558
        %v563 = vsel %vm274, %v500, 0
        %v566 = vsel %vm274, %v501, 0
        %568 = vmatpush.msra.mxu0 0.0
        %569 = vmatpush.msra.mxu0 0.0
        %570 = vmatpush.msra.mxu0 0.0
        %571 = vmatpush.msra.mxu0 0.0
        %572 = vmatpush.msra.mxu0 0.0
        %573 = vmatpush.msra.mxu0 0.0
        %574 = vmatpush.msra.mxu0 0.0
        %575 = vmatpush.msra.mxu0 0.0
        %576 = vmatpush.msra.mxu0 0.0
        %577 = vmatpush.msra.mxu0 0.0
        %578 = vmatpush.msra.mxu0 0.0
        %579 = vmatpush.msra.mxu0 0.0
        %580 = vmatpush.msra.mxu0 0.0
        %581 = vmatpush.msra.mxu0 0.0
        %582 = vmatpush.msra.mxu0 %v253
        %583 = vmatpush.msra.mxu0 %v252
        %584 = vmatmul.f32.gmra.mxu0 %v563
        %v585 = vpop.f32.mrf.mxu0
        %v586 = vadd.f32 0.0, %v585
        %587 = vmatmul.f32.gmra.mxu0 %v566
        %v588 = vpop.f32.mrf.mxu0
        %v589 = vadd.f32 0.0, %v588
        %590 = vdwg.mxu0
        %v592 = vsel %vm274, %v494, 0
        %v595 = vsel %vm274, %v495, 0
        %597 = vmatpush.msra.mxu0 0.0
        %598 = vmatpush.msra.mxu0 0.0
        %599 = vmatpush.msra.mxu0 0.0
        %600 = vmatpush.msra.mxu0 0.0
        %601 = vmatpush.msra.mxu0 0.0
        %602 = vmatpush.msra.mxu0 0.0
        %603 = vmatpush.msra.mxu0 0.0
        %604 = vmatpush.msra.mxu0 0.0
        %605 = vmatpush.msra.mxu0 0.0
        %606 = vmatpush.msra.mxu0 0.0
        %607 = vmatpush.msra.mxu0 0.0
        %608 = vmatpush.msra.mxu0 0.0
        %609 = vmatpush.msra.mxu0 0.0
        %610 = vmatpush.msra.mxu0 0.0
        %611 = vmatpush.msra.mxu0 %v250
        %612 = vmatpush.msra.mxu0 %v249
        %613 = vmatmul.f32.gmra.mxu0 %v592
        %v614 = vpop.f32.mrf.mxu0
        %v615 = vadd.f32 %v586, %v614
        %616 = vmatmul.f32.gmra.mxu0 %v595
        %v617 = vpop.f32.mrf.mxu0
        %v618 = vadd.f32 %v589, %v617
        %619 = vdwg.mxu0
        %620 = vst.msk [vmem:[#allocation3] sm:$0xff] %vm333, %v615
        %621 = vst.msk [vmem:[#allocation3 + $0x8] sm:$0xff] %vm333, %v618
        %v622 = vld [vmem:[#allocation2] sm:$0xff]
        %v623 = vld [vmem:[#allocation2 + $0x8] sm:$0xff]
        %v624 = vld [vmem:[#allocation3] sm:$0xff]
        %v625 = vld [vmem:[#allocation3 + $0x8] sm:$0xff]
        %626 = vmatpush.msra.mxu0 0.0
        %627 = vmatpush.msra.mxu0 0.0
        %628 = vmatpush.msra.mxu0 0.0
        %629 = vmatpush.msra.mxu0 0.0
        %630 = vmatpush.msra.mxu0 0.0
        %631 = vmatpush.msra.mxu0 0.0
        %632 = vmatpush.msra.mxu0 0.0
        %633 = vmatpush.msra.mxu0 0.0
        %634 = vmatpush.msra.mxu0 0.0
        %635 = vmatpush.msra.mxu0 0.0
        %636 = vmatpush.msra.mxu0 0.0
        %637 = vmatpush.msra.mxu0 0.0
        %638 = vmatpush.msra.mxu0 0.0
        %639 = vmatpush.msra.mxu0 0.0
        %640 = vmatpush.msra.mxu0 %v625
        %641 = vmatpush.msra.mxu0 %v624
        %642 = vmatmul.f32.gmra.mxu0 %v401
        %v643 = vpop.f32.mrf.mxu0
        %v644 = vadd.f32 0.0, %v643
        %645 = vmatmul.f32.gmra.mxu0 %v404
        %v646 = vpop.f32.mrf.mxu0
        %v647 = vadd.f32 0.0, %v646
        %648 = vmatmul.f32.gmra.mxu0 %v407
        %v649 = vpop.f32.mrf.mxu0
        %v650 = vadd.f32 0.0, %v649
        %651 = vmatmul.f32.gmra.mxu0 %v410
        %v652 = vpop.f32.mrf.mxu0
        %v653 = vadd.f32 0.0, %v652
        %654 = vdwg.mxu0
        %655 = vmatpush.msra.mxu0 0.0
        %656 = vmatpush.msra.mxu0 0.0
        %657 = vmatpush.msra.mxu0 0.0
        %658 = vmatpush.msra.mxu0 0.0
        %659 = vmatpush.msra.mxu0 0.0
        %660 = vmatpush.msra.mxu0 0.0
        %661 = vmatpush.msra.mxu0 0.0
        %662 = vmatpush.msra.mxu0 0.0
        %663 = vmatpush.msra.mxu0 0.0
        %664 = vmatpush.msra.mxu0 0.0
        %665 = vmatpush.msra.mxu0 0.0
        %666 = vmatpush.msra.mxu0 0.0
        %667 = vmatpush.msra.mxu0 0.0
        %668 = vmatpush.msra.mxu0 0.0
        %669 = vmatpush.msra.mxu0 %v623
        %670 = vmatpush.msra.mxu0 %v622
        %671 = vmatmul.f32.gmra.mxu0 %v442
        %v672 = vpop.f32.mrf.mxu0
        %v673 = vadd.f32 %v644, %v672
        %674 = vmatmul.f32.gmra.mxu0 %v445
        %v675 = vpop.f32.mrf.mxu0
        %v676 = vadd.f32 %v647, %v675
        %677 = vmatmul.f32.gmra.mxu0 %v448
        %v678 = vpop.f32.mrf.mxu0
        %v679 = vadd.f32 %v650, %v678
        %680 = vmatmul.f32.gmra.mxu0 %v451
        %v681 = vpop.f32.mrf.mxu0
        %v682 = vadd.f32 %v653, %v681
        %683 = vdwg.mxu0
        %v684 = vmul.f32 %v673, 0.49999997
        %v685 = vmul.f32 %v676, 0.49999997
        %v686 = vmul.f32 %v679, 0.49999997
        %v687 = vmul.f32 %v682, 0.49999997
        %s688 = scalar_lea.vmem %s227, 32 [#allocation4]
        %689 = vst.msk [vmem:[%s688] sm:$0xff] %vm333, %v684
        %690 = vst.msk [vmem:[%s688 + $0x8] sm:$0xff] %vm333, %v685
        %691 = vst.msk [vmem:[%s688 + $0x10] sm:$0xff] %vm333, %v686
        %692 = vst.msk [vmem:[%s688 + $0x18] sm:$0xff] %vm333, %v687
        %s693 = sand.u32 %s131, 1
        %s694 = scalar_lea.sflag [#allocation5], %s693
        %s695 = sand.u32 %s131, 1
        %s696 = smul.addr %s695, 64
        %s697 = scalar_lea.vmem [#allocation4], %s696
        // Predicated region
        $region33: #{_lambda_.1} parent=31 // pred_check
          %p698 = pneg %p141
        $region34: #{_lambda_.1} parent=31 // pred_check_branch
          %700 = sbr.rel (%p698) target = $region36
        $region35: #{_lambda_.1} parent=31 // pred_region
          %s701 = smul.u32 2, %s24
          %s702 = smul.u32 4, %s25
          %704 = vsyncadd %s694, 0
          %s705 = sadd.s32 %s26, %s702
          %s706 = smul.addr %s701, 4
          %s707 = sadd.s32 %s705, %s706
          %s708 = smul.addr %s23, 8
          %s709 = sadd.s32 %s707, %s708
          %s710 = smul.addr %s709, 8
          %s711 = scalar_lea.hbm %s3, %s710
          %s712 = sshll.u32 %s697, 4
          %s713 = int_to_ptr.vmem [resolvable:$true] %s712
          %s714 = sshll.u32 %s711, 4
          %s715 = int_to_ptr.hbm [resolvable:$true] %s714
          %720 = dma.vmem_to_hbm [thread:$0]  %s713, 1024, %s715, %s694, 128, 128, 8
        $region36: #{_lambda_.1} parent=31 // pred_fallthru
          _
      $region32: #{_lambda_.1} parent=5 // pred_fallthru
        _
      %p721 = scmp.le.s32.totalorder 2, %s12
      // Predicated region
      $region37: #{_lambda_.1} parent=5 // pred_check
        %p722 = pneg %p721
      $region38: #{_lambda_.1} parent=5 // pred_check_branch
        %724 = sbr.rel (%p722) target = $region40
      $region39: #{_lambda_.1} parent=5 // pred_region
        %s725 = ssub.s32 %s12, 2
        // Predicated region
        $region41: #{_lambda_.1} parent=39 // pred_check
          %p726 = pneg %p147
        $region42: #{_lambda_.1} parent=39 // pred_check_branch
          %728 = sbr.rel (%p726) target = $region44
        $region43: #{_lambda_.1} parent=39 // pred_region
          %s729 = sand.u32 %s132, 1
          %s730 = scalar_lea.sflag [#allocation5], %s729
          %s731 = sand.u32 %s132, 1
          %s732 = smul.addr %s731, 64
          %s733 = scalar_lea.vmem [#allocation4], %s732
          %735 = dma.done %s730, 1024
        $region44: #{_lambda_.1} parent=39 // pred_fallthru
          _
      $region40: #{_lambda_.1} parent=5 // pred_fallthru
        _
    $region6: #{_lambda_.1} parent=1 // loop_footer
      %s16 = sadd.s32 1, %s12
    $region7: #{_lambda_.1} parent=1 // loop_footer_branch
      %11 = sbr.rel target = $region3
    $region8: #{_lambda_.1} parent=1 // loop_exit
      _
    %736 = vsyncpa [#allocation5], 1
    %s737 = scalar_lea.sflag [#allocation5], 1
    %738 = vsyncpa %s737, 1

</llo_original>
